<compile_context>
chip_gen: v7x
topology: tpu7x:2x2x1
jax: 0.10.0
libtpu: 0.0.40
codegen_flags: <defaults>
</compile_context>

<pallas_src>
import jax
import jax.numpy as jnp
from jax.experimental import pallas as pl
from jax.experimental.pallas import tpu as pltpu

_MAX_LANE_BLOCK = 32 * 1024        # preferred cap on lanes per block
_MIN_GOOD_LANE_BLOCK = 2048        # below this, allow lane blocks above the cap


# --------------------------------------------------------------------------
# trace-time helpers (pure Python)
# --------------------------------------------------------------------------
def _divisors(x):
    ds = set()
    d = 1
    while d * d <= x:
        if x % d == 0:
            ds.add(d)
            ds.add(x // d)
        d += 1
    return sorted(ds)


def _vmem_capacity_bytes():
    """Physical VMEM per TensorCore; conservative 64 MiB default (v7x)."""
    try:
        info = pltpu.get_tpu_info()
        cap = getattr(info, "vmem_capacity_bytes", None)
        if cap:
            return int(cap)
    except Exception:
        pass
    return 64 * 1024 * 1024


def _vmem_budget():
    cap = _vmem_capacity_bytes()
    vmem_limit = int(cap * 0.70)          # v5e/v6e: ~90 MiB, v7x: ~45 MiB
    work_budget = int(vmem_limit * 0.85)  # headroom for compiler scratch / sems
    return vmem_limit, work_budget


def _pick_lane_block(length, stream_bytes_per_elem, work_budget):
    """Multiple-of-128 divisor of `length` sized by the VMEM byte budget."""
    lane_divs = [d for d in _divisors(length) if d % 128 == 0]
    if not lane_divs:
        return None

    def fits(d):
        # double-buffered streams at the minimum row block (8) + output block
        return 2 * 8 * d * stream_bytes_per_elem + 2 * 8 * d * 4 <= work_budget

    fitting = [d for d in lane_divs if fits(d)]
    if not fitting:
        return min(lane_divs)
    capped = [d for d in fitting if d <= _MAX_LANE_BLOCK]
    if capped and (max(capped) >= _MIN_GOOD_LANE_BLOCK or max(capped) == max(fitting)):
        return max(capped)
    # degenerate divisor structure (e.g. 128 * large prime): take the largest
    # multiple-of-128 divisor that still fits the byte budget so DMA rows stay
    # long and contiguous instead of 512 B strided reads.
    return max(fitting)


def _pick_row_block(n_rows, lb, stream_bytes_per_elem, work_budget, min_itemsize):
    """Multiple-of-8 divisor of n_rows sized by the byte budget (bytes, not elems)."""
    assert n_rows % 8 == 0
    out_bytes = 2 * 8 * lb * 4

    def fits(nb):
        return 2 * nb * lb * stream_bytes_per_elem + out_bytes <= work_budget

    cands = [d for d in _divisors(n_rows) if d % 8 == 0 and fits(d)]
    if not cands:
        return 8
    # keep >= 4 row blocks when possible so the v7x 2-TC split stays balanced
    pref = [d for d in cands if n_rows // d >= 4]
    pool = pref if pref else cands
    # prefer sublane-packing-friendly multiples for narrow input dtypes
    row_mult = 32 if min_itemsize == 1 else (16 if min_itemsize == 2 else 8)
    pref2 = [d for d in pool if d % row_mult == 0]
    if pref2:
        pool = pref2
    return max(pool)


def _pick_row_block_3d(n_rows, spatial):
    """Leading-dim block for the (N, C, L) fallback; bound padded VMEM per stream."""
    budget_elems = 1024 * 1024  # 4 MiB f32 per stream block (channel padded to 8 sublanes)
    best = 1
    for d in _divisors(n_rows):
        if d * 8 * spatial <= budget_elems and d > best:
            best = d
    return best


# --------------------------------------------------------------------------
# kernels
# --------------------------------------------------------------------------
def _wl1_dense_kernel(o_ref, r_ref, w_ref, out_ref):
    """grid = (row_blocks, lane_blocks, channels); weight tile reused across channels.

    The output block (1, 8, lb) is the accumulator (resident across the l and c
    axes).  Each step folds the (nb, lb) tile along the leading dim only --
    a reshape that never crosses (8, 128) tiles, so the fold is pure VPU adds.
    """
    l = pl.program_id(1)
    c = pl.program_id(2)

    t = jnp.abs(o_ref[...].astype(jnp.float32) - r_ref[...].astype(jnp.float32))
    t = t * w_ref[...].astype(jnp.float32)
    nb, lb = t.shape
    folded = t.reshape(nb // 8, 8, lb).sum(axis=0)

    @pl.when((l == 0) & (c == 0))
    def _():
        out_ref[...] = jnp.zeros_like(out_ref)

    out_ref[...] += folded[None, :, :]


def _l1_dense_kernel(o_ref, r_ref, out_ref):
    """Unweighted variant: grid = (row_blocks, lane_blocks); no weight stream."""
    l = pl.program_id(1)

    t = jnp.abs(o_ref[...].astype(jnp.float32) - r_ref[...].astype(jnp.float32))
    nb, lb = t.shape
    folded = t.reshape(nb // 8, 8, lb).sum(axis=0)

    @pl.when(l == 0)
    def _():
        out_ref[...] = jnp.zeros_like(out_ref)

    out_ref[...] += folded[None, :, :]


def _wl1_chan_kernel(o_ref, r_ref, w_ref, out_ref):
    """Fallback: (nb, C, L) obs blocks, (nb, 1, L) weight blocks; one partial per step."""
    t = jnp.abs(o_ref[...].astype(jnp.float32) - r_ref[...].astype(jnp.float32))
    t = t * w_ref[...].astype(jnp.float32)     # broadcast over the channel axis in VMEM
    out_ref[...] = jnp.full(out_ref.shape, jnp.sum(t), jnp.float32)


def _l1_chan_kernel(o_ref, r_ref, out_ref):
    t = jnp.abs(o_ref[...].astype(jnp.float32) - r_ref[...].astype(jnp.float32))
    out_ref[...] = jnp.full(out_ref.shape, jnp.sum(t), jnp.float32)


# --------------------------------------------------------------------------
# pallas_call wrappers
# --------------------------------------------------------------------------
def _pad_rows(arrs, n_rows):
    pad = (-n_rows) % 8
    if pad == 0:
        return arrs, n_rows
    # obs and rec padded identically with zeros -> |o - r| == 0 on padded rows.
    return [jnp.pad(a, ((0, pad), (0, 0))) for a in arrs], n_rows + pad


def _weighted_l1_sum_dense(obs2d, rec2d, w2d, num_channels):
    n_rows, cols = obs2d.shape
    spatial = cols // num_channels
    vmem_limit, budget = _vmem_budget()
    stream_bytes = (obs2d.dtype.itemsize + rec2d.dtype.itemsize + w2d.dtype.itemsize)
    min_item = min(obs2d.dtype.itemsize, rec2d.dtype.itemsize, w2d.dtype.itemsize)

    (obs2d, rec2d, w2d), n_rows = _pad_rows([obs2d, rec2d, w2d], n_rows)

    lb = _pick_lane_block(spatial, stream_bytes, budget)
    nb = _pick_row_block(n_rows, lb, stream_bytes, budget, min_item)
    assert nb % 8 == 0 and spatial % lb == 0 and n_rows % nb == 0
    n_row_blocks = n_rows // nb
    n_lane_blocks = spatial // lb

    obs_spec = pl.BlockSpec((nb, lb), lambda i, l, c: (i, c * n_lane_blocks + l))
    w_spec = pl.BlockSpec((nb, lb), lambda i, l, c: (i, l))   # ignores channel index
    out_spec = pl.BlockSpec((1, 8, lb), lambda i, l, c: (i, 0, 0))

    cost = pl.CostEstimate(
        flops=4 * n_rows * cols,
        transcendentals=0,
        bytes_accessed=(obs2d.size * obs2d.dtype.itemsize
                        + rec2d.size * rec2d.dtype.itemsize
                        + w2d.size * w2d.dtype.itemsize
                        + n_row_blocks * 8 * lb * 4))

    partials = pl.pallas_call(
        _wl1_dense_kernel,
        out_shape=jax.ShapeDtypeStruct((n_row_blocks, 8, lb), jnp.float32),
        grid_spec=pltpu.PrefetchScalarGridSpec(
            num_scalar_prefetch=0,
            grid=(n_row_blocks, n_lane_blocks, num_channels),
            in_specs=[obs_spec, obs_spec, w_spec],
            out_specs=out_spec,
        ),
        compiler_params=pltpu.CompilerParams(
            dimension_semantics=("parallel", "arbitrary", "arbitrary"),
            vmem_limit_bytes=vmem_limit),
        cost_estimate=cost,
    )(obs2d, rec2d, w2d)
    return jnp.sum(partials)


def _l1_sum_dense(obs2d, rec2d):
    n_rows, cols = obs2d.shape
    vmem_limit, budget = _vmem_budget()
    stream_bytes = obs2d.dtype.itemsize + rec2d.dtype.itemsize
    min_item = min(obs2d.dtype.itemsize, rec2d.dtype.itemsize)

    (obs2d, rec2d), n_rows = _pad_rows([obs2d, rec2d], n_rows)

    lb = _pick_lane_block(cols, stream_bytes, budget)
    nb = _pick_row_block(n_rows, lb, stream_bytes, budget, min_item)
    assert nb % 8 == 0 and cols % lb == 0 and n_rows % nb == 0
    n_row_blocks = n_rows // nb
    n_lane_blocks = cols // lb

    spec = pl.BlockSpec((nb, lb), lambda i, l: (i, l))
    out_spec = pl.BlockSpec((1, 8, lb), lambda i, l: (i, 0, 0))

    cost = pl.CostEstimate(
        flops=3 * n_rows * cols,
        transcendentals=0,
        bytes_accessed=(obs2d.size * obs2d.dtype.itemsize
                        + rec2d.size * rec2d.dtype.itemsize
                        + n_row_blocks * 8 * lb * 4))

    partials = pl.pallas_call(
        _l1_dense_kernel,
        out_shape=jax.ShapeDtypeStruct((n_row_blocks, 8, lb), jnp.float32),
        grid_spec=pltpu.PrefetchScalarGridSpec(
            num_scalar_prefetch=0,
            grid=(n_row_blocks, n_lane_blocks),
            in_specs=[spec, spec],
            out_specs=out_spec,
        ),
        compiler_params=pltpu.CompilerParams(
            dimension_semantics=("parallel", "arbitrary"),
            vmem_limit_bytes=vmem_limit),
        cost_estimate=cost,
    )(obs2d, rec2d)
    return jnp.sum(partials)


def _weighted_l1_sum_chan(obs3, rec3, w3):
    n_rows, num_channels, spatial = obs3.shape
    vmem_limit, _ = _vmem_budget()
    nb = _pick_row_block_3d(n_rows, spatial)
    n_row_blocks = n_rows // nb

    o_spec = pl.BlockSpec((nb, num_channels, spatial), lambda i: (i, 0, 0))
    w_spec = pl.BlockSpec((nb, 1, spatial), lambda i: (i, 0, 0))
    out_spec = pl.BlockSpec((1, 8, 128), lambda i: (i, 0, 0))

    partials = pl.pallas_call(
        _wl1_chan_kernel,
        out_shape=jax.ShapeDtypeStruct((n_row_blocks, 8, 128), jnp.float32),
        grid_spec=pltpu.PrefetchScalarGridSpec(
            num_scalar_prefetch=0,
            grid=(n_row_blocks,),
            in_specs=[o_spec, o_spec, w_spec],
            out_specs=out_spec,
        ),
        compiler_params=pltpu.CompilerParams(
            dimension_semantics=("parallel",),
            vmem_limit_bytes=vmem_limit),
    )(obs3, rec3, w3)
    return jnp.sum(partials[:, 0, 0])


def _l1_sum_chan(obs3, rec3):
    n_rows, num_channels, spatial = obs3.shape
    vmem_limit, _ = _vmem_budget()
    nb = _pick_row_block_3d(n_rows, spatial)
    n_row_blocks = n_rows // nb

    o_spec = pl.BlockSpec((nb, num_channels, spatial), lambda i: (i, 0, 0))
    out_spec = pl.BlockSpec((1, 8, 128), lambda i: (i, 0, 0))

    partials = pl.pallas_call(
        _l1_chan_kernel,
        out_shape=jax.ShapeDtypeStruct((n_row_blocks, 8, 128), jnp.float32),
        grid_spec=pltpu.PrefetchScalarGridSpec(
            num_scalar_prefetch=0,
            grid=(n_row_blocks,),
            in_specs=[o_spec, o_spec],
            out_specs=out_spec,
        ),
        compiler_params=pltpu.CompilerParams(
            dimension_semantics=("parallel",),
            vmem_limit_bytes=vmem_limit),
    )(obs3, rec3)
    return jnp.sum(partials[:, 0, 0])


# --------------------------------------------------------------------------
# public entry point: matches ReconstructionLoss.forward
# --------------------------------------------------------------------------
def reconstruction_loss(observations, reconstructed_observations, weights=None):
    """
    observations / reconstructed_observations: (bs, num_obs, 3, H, W)
    weights (optional):                        (bs, num_obs, 1, h, w)
    returns: scalar float32 == mean(|o - r| * w)
    """
    assert observations.shape[3] == reconstructed_observations.shape[3]
    assert observations.shape[4] == reconstructed_observations.shape[4]
    bs, n, c, h, w_dim = observations.shape
    n_rows = bs * n
    spatial = h * w_dim
    count = n_rows * c * spatial                       # un-padded element count

    obs2d = observations.reshape(n_rows, c * spatial)
    rec2d = reconstructed_observations.reshape(n_rows, c * spatial)

    if weights is None:
        if (c * spatial) % 128 == 0:
            total = _l1_sum_dense(obs2d, rec2d)
        else:
            total = _l1_sum_chan(observations.reshape(n_rows, c, spatial),
                                 reconstructed_observations.reshape(n_rows, c, spatial))
    else:
        assert weights.shape[2] == 1, "weights are expected to have a single channel"
        w = weights
        if w.shape[3] != h or w.shape[4] != w_dim:
            # TODO(synk): bilinear weight-map resize (rare path) is plain-JAX glue
            # (jax.image.resize, half-pixel centers + antialias=False, intended to
            # match F.interpolate(mode='bilinear', align_corners=False)); equivalence
            # for downscaling is not bit-verified against PyTorch.
            w = jax.image.resize(w.astype(jnp.float32), (bs, n, 1, h, w_dim),
                                 method="bilinear", antialias=False)
        if spatial % 128 == 0:
            total = _weighted_l1_sum_dense(obs2d, rec2d, w.reshape(n_rows, spatial), c)
        else:
            total = _weighted_l1_sum_chan(observations.reshape(n_rows, c, spatial),
                                          reconstructed_observations.reshape(n_rows, c, spatial),
                                          w.reshape(n_rows, 1, spatial))

    return total / jnp.float32(count)


# --------------------------------------------------------------------------
# self-test
# --------------------------------------------------------------------------
if __name__ == "__main__":
    key = jax.random.PRNGKey(0)
    k_obs, k_rec, k_w, k_ws = jax.random.split(key, 4)

    bs, num_obs, C, H, W = 2, 4, 3, 16, 16
    observations = jax.random.normal(k_obs, (bs, num_obs, C, H, W), jnp.float32)
    reconstructions = jax.random.normal(k_rec, (bs, num_obs, C, H, W), jnp.float32)
    weights = jax.random.uniform(k_w, (bs, num_obs, 1, H, W), jnp.float32)

    # 1) Weighted case (dense channel-reuse kernel).
    loss_w = jax.block_until_ready(reconstruction_loss(observations, reconstructions, weights))
    ref_w = jnp.mean(jnp.abs(observations - reconstructions)
                     * jnp.broadcast_to(weights, observations.shape))
    assert jnp.allclose(loss_w, ref_w, rtol=1e-5, atol=1e-6), (loss_w, ref_w)

    # 2) Unweighted case (dedicated kernel, no ones tensor streamed).
    loss_u = jax.block_until_ready(reconstruction_loss(observations, reconstructions, None))
    ref_u = jnp.mean(jnp.abs(observations - reconstructions))
    assert jnp.allclose(loss_u, ref_u, rtol=1e-5, atol=1e-6), (loss_u, ref_u)

    # 3) Weighted case with a smaller weight map (exercises the resize glue).
    weights_small = jax.random.uniform(k_ws, (bs, num_obs, 1, H // 2, W // 2), jnp.float32)
    loss_r = jax.block_until_ready(
        reconstruction_loss(observations, reconstructions, weights_small))
    w_resized = jax.image.resize(weights_small, (bs, num_obs, 1, H, W),
                                 method="bilinear", antialias=False)
    ref_r = jnp.mean(jnp.abs(observations - reconstructions)
                     * jnp.broadcast_to(w_resized, observations.shape))
    assert jnp.allclose(loss_r, ref_r, rtol=1e-5, atol=1e-6), (loss_r, ref_r)

    # 4) bf16 inputs + a row count that is not a multiple of 8 (zero-row padding path).
    obs_bf = jax.random.normal(k_obs, (1, 3, C, H, W), jnp.bfloat16)
    rec_bf = jax.random.normal(k_rec, (1, 3, C, H, W), jnp.bfloat16)
    loss_b = jax.block_until_ready(reconstruction_loss(obs_bf, rec_bf, None))
    ref_b = jnp.mean(jnp.abs(obs_bf.astype(jnp.float32) - rec_bf.astype(jnp.float32)))
    assert jnp.allclose(loss_b, ref_b, rtol=1e-3, atol=1e-4), (loss_b, ref_b)

    print("KERNEL_OK")
</pallas_src>

<mosaic_0001>
module attributes {stable_mosaic.version = 11 : i64} {
  func.func @_wl1_dense_kernel(%arg0: i32, %arg1: i32, %arg2: i32, %arg3: memref<8x256xf32, #tpu.memory_space<vmem>>, %arg4: memref<8x256xf32, #tpu.memory_space<vmem>>, %arg5: memref<8x256xf32, #tpu.memory_space<vmem>>, %arg6: memref<1x8x256xf32, #tpu.memory_space<vmem>>) attributes {dimension_semantics = [#tpu.dimension_semantics<parallel>, #tpu.dimension_semantics<arbitrary>, #tpu.dimension_semantics<arbitrary>], iteration_bounds = array<i64: 1, 1, 3>, scalar_prefetch = 0 : i64, scratch_operands = 0 : i64, tpu.core_type = #tpu.core_type<tc>, window_params = [{transform_indices = @transform_0, window_bounds = array<i64: 8, 256>}, {transform_indices = @transform_1, window_bounds = array<i64: 8, 256>}, {transform_indices = @transform_2, window_bounds = array<i64: 8, 256>}, {transform_indices = @transform_3, window_bounds = array<i64: 1, 8, 256>}]} {
    %c0 = arith.constant 0 : index
    %c0_0 = arith.constant 0 : index
    %0 = vector.load %arg3[%c0, %c0_0] : memref<8x256xf32, #tpu.memory_space<vmem>>, vector<8x256xf32>
    %c0_1 = arith.constant 0 : index
    %c0_2 = arith.constant 0 : index
    %1 = vector.load %arg4[%c0_1, %c0_2] : memref<8x256xf32, #tpu.memory_space<vmem>>, vector<8x256xf32>
    %2 = arith.subf %0, %1 : vector<8x256xf32>
    %3 = math.absf %2 : vector<8x256xf32>
    %c0_3 = arith.constant 0 : index
    %c0_4 = arith.constant 0 : index
    %4 = vector.load %arg5[%c0_3, %c0_4] : memref<8x256xf32, #tpu.memory_space<vmem>>, vector<8x256xf32>
    %5 = arith.mulf %3, %4 : vector<8x256xf32>
    %6 = vector.shape_cast %5 : vector<8x256xf32> to vector<1x8x256xf32>
    %cst = arith.constant dense<0.000000e+00> : vector<8x256xf32>
    %7 = vector.multi_reduction <add>, %6, %cst [0] : vector<1x8x256xf32> to vector<8x256xf32>
    %c0_i32 = arith.constant 0 : i32
    %8 = arith.cmpi eq, %arg1, %c0_i32 : i32
    %c0_i32_5 = arith.constant 0 : i32
    %9 = arith.cmpi eq, %arg2, %c0_i32_5 : i32
    %10 = arith.andi %8, %9 : i1
    %11 = arith.extui %10 : i1 to i32
    %c0_i32_6 = arith.constant 0 : i32
    %12 = arith.cmpi ne, %11, %c0_i32_6 : i32
    scf.if %12 {
      %cst_13 = arith.constant 0.000000e+00 : f32
      %17 = vector.broadcast %cst_13 : f32 to vector<1x8x256xf32>
      %c0_14 = arith.constant 0 : index
      %c0_15 = arith.constant 0 : index
      %c0_16 = arith.constant 0 : index
      %18 = vector.load %arg6[%c0_14, %c0_15, %c0_16] : memref<1x8x256xf32, #tpu.memory_space<vmem>>, vector<1x8x256xf32>
      tpu.vector_store %arg6[%c0_14, %c0_15, %c0_16], %17 {strides = array<i32>} : memref<1x8x256xf32, #tpu.memory_space<vmem>>, vector<1x8x256xf32>,
    } else {
    }
    %c0_7 = arith.constant 0 : index
    %c0_8 = arith.constant 0 : index
    %c0_9 = arith.constant 0 : index
    %13 = vector.load %arg6[%c0_7, %c0_8, %c0_9] : memref<1x8x256xf32, #tpu.memory_space<vmem>>, vector<1x8x256xf32>
    %14 = vector.shape_cast %7 : vector<8x256xf32> to vector<1x8x256xf32>
    %15 = arith.addf %13, %14 : vector<1x8x256xf32>
    %c0_10 = arith.constant 0 : index
    %c0_11 = arith.constant 0 : index
    %c0_12 = arith.constant 0 : index
    %16 = vector.load %arg6[%c0_10, %c0_11, %c0_12] : memref<1x8x256xf32, #tpu.memory_space<vmem>>, vector<1x8x256xf32>
    tpu.vector_store %arg6[%c0_10, %c0_11, %c0_12], %15 {strides = array<i32>} : memref<1x8x256xf32, #tpu.memory_space<vmem>>, vector<1x8x256xf32>,
    return
  }
  func.func @transform_0(%arg0: i32, %arg1: i32, %arg2: i32) -> (i32, i32) {
    %c1_i32 = arith.constant 1 : i32
    %0 = arith.muli %arg2, %c1_i32 : i32
    %1 = arith.addi %0, %arg1 : i32
    %c0_i32 = arith.constant 0 : i32
    return %arg0, %1 : i32, i32
  }
  func.func @transform_1(%arg0: i32, %arg1: i32, %arg2: i32) -> (i32, i32) {
    %c1_i32 = arith.constant 1 : i32
    %0 = arith.muli %arg2, %c1_i32 : i32
    %1 = arith.addi %0, %arg1 : i32
    %c0_i32 = arith.constant 0 : i32
    return %arg0, %1 : i32, i32
  }
  func.func @transform_2(%arg0: i32, %arg1: i32, %arg2: i32) -> (i32, i32) {
    %c0_i32 = arith.constant 0 : i32
    return %arg0, %arg1 : i32, i32
  }
  func.func @transform_3(%arg0: i32, %arg1: i32, %arg2: i32) -> (i32, i32, i32) {
    %c0_i32 = arith.constant 0 : i32
    %c0_i32_0 = arith.constant 0 : i32
    %c0_i32_1 = arith.constant 0 : i32
    return %arg0, %c0_i32, %c0_i32_0 : i32, i32, i32
  }
}

</mosaic_0001>

<llo_original>
// kernel: tpu_custom_call.1
$region0: #{tpu_custom_call.1}
  #allocation0 [shape = 'u32[]', space=smem, size = 0x4, offset = 0x4, fixed_abs, tag = 'smem constant byte address 0x4 - core index']
  #allocation1 [shape = 'u32[144,128]{1,0:T(1,128)}', space=vmem, size = 0x12000, scoped, tag = 'internal scratch']
  %s0 = inlined_call_operand.hbm [shape: f32[8,768], index: 0, kind: input, shape index: {}]
  %s1 = inlined_call_operand.hbm [shape: f32[8,768], index: 1, kind: input, shape index: {}]
  %s2 = inlined_call_operand.hbm [shape: f32[8,256], index: 2, kind: input, shape index: {}]
  %s3 = inlined_call_operand.hbm [shape: f32[1,8,256], index: 3, kind: output, shape index: {}]
  %s4 = sld [smem:[#allocation0]]
  $region61: #{tpu_custom_call.1} parent=0
    _
  %s6 = ssub.s32 1, %s4
  %s7 = scalar_select 0, %s6, %s4
  $region1: #{tpu_custom_call.1} parent=0
    #allocation2 [shape = 'u8[16384]{0}', space=vmem, size = 0x4000, scoped, tag = 'input window, operand 0']
    #allocation3 [shape = 's32[2]{0}', space=sflag, size = 0x8, scoped, tag = 'scoped memory for tpu_custom_call.1']
    #allocation4 [shape = 's32[2]{0}', space=sflag, size = 0x8, scoped, tag = 'scoped memory for tpu_custom_call.1']
    #allocation5 [shape = 'u8[16384]{0}', space=vmem, size = 0x4000, scoped, tag = 'input window, operand 1']
    #allocation6 [shape = 's32[2]{0}', space=sflag, size = 0x8, scoped, tag = 'scoped memory for tpu_custom_call.1']
    #allocation7 [shape = 'u8[8192]{0}', space=vmem, size = 0x2000, scoped, tag = 'input window, operand 2, single buffered']
    #allocation8 [shape = 'u8[8192]{0}', space=vmem, size = 0x2000, scoped, tag = 'output window, operand 0, single buffered']
    %8 = vsyncpa [#allocation3], 0
    %s9 = scalar_lea.sflag [#allocation3], 1
    %10 = vsyncpa %s9, 0
    %11 = vsyncpa [#allocation6], 0
    %s12 = scalar_lea.sflag [#allocation6], 1
    %13 = vsyncpa %s12, 0
    %14 = vsyncpa [#allocation4], 0
    loop: start=0, step=1, limit=5
    $region2: #{tpu_custom_call.1} parent=1 // loop_pre_header
      _
    $region3: #{tpu_custom_call.1} parent=1 // loop_header
      %s16 = sphi 0, %s20
      %p17 = scmp.ge.s32.totalorder %s16, 5
      %s23 = sphi 0, %s42
      %s24 = sphi 0, %s38
      %s25 = sphi 0, %s34
      %s26 = sphi 0, %s23
      %s27 = sphi 0, %s24
      %s28 = sphi 0, %s25
      %s29 = sphi 0, %s26
      %s30 = sphi 0, %s27
      %s31 = sphi 0, %s28
      %s49 = sphi 0, %s51
      %s52 = sphi 0, %s49
      %s53 = sphi 0, %s52
      %s69 = sphi 0, %s53
      %s79 = sphi 0, %s81
      %s82 = sphi 0, %s79
      %s83 = sphi 0, %s82
      %s99 = sphi 0, %s83
      %s107 = sphi 0, %s109
      %s110 = sphi 0, %s107
      %s111 = sphi 0, %s110
      %s127 = sphi 0, %s111
      %s133 = sphi 0, %s135
      %s136 = sphi 0, %s133
      %s137 = sphi 0, %s136
      %s153 = sphi 0, %s137
    $region4: #{tpu_custom_call.1} parent=1 // loop_header_branch
      %19 = sbr.rel (%p17) target = $region8
    $region5: #{tpu_custom_call.1} parent=1 // loop_body
      %s21 = ssub.s32 %s16, 1
      %s22 = ssub.s32 %s16, 2
      %s32 = sadd.s32 1, %s25
      %p33 = scmp.ge.s32.totalorder %s32, 3
      %s34 = scalar_select %p33, 0, %s32
      %s35 = sadd.s32 1, %s24
      %s36 = scalar_select %p33, %s35, %s24
      %p37 = scmp.ge.s32.totalorder %s36, 1
      %s38 = scalar_select %p37, 0, %s36
      %s39 = sadd.s32 1, %s23
      %s40 = scalar_select %p37, %s39, %s23
      %p41 = scmp.ge.s32.totalorder %s40, 1
      %s42 = scalar_select %p41, 0, %s40
      %s43 = sadd.s32 %s25, %s24
      %s44 = sadd.s32 %s34, %s38
      %s45 = ssub.s32 %s23, %s42
      %s46 = ssub.s32 %s43, %s44
      %s47 = sor.u32 %s45, %s46
      %p48 = scmp.eq.s32.totalorder %s47, 0
      %s50 = sadd.s32 %s49, 1
      %s51 = scalar_select %p48, %s49, %s50
      %p54 = pneg %p48
      %p55 = scmp.eq.s32.totalorder %s16, 2
      %p56 = por %p54, %p55
      %p57 = scmp.ne.s32.totalorder %s49, %s52
      %p58 = scmp.eq.s32.totalorder %s16, 0
      %p59 = por %p57, %p58
      %p60 = scmp.ne.s32.totalorder %s49, %s52
      %p61 = scmp.eq.s32.totalorder %s21, 2
      %p62 = por %p60, %p61
      %p63 = scmp.ne.s32.totalorder %s52, %s53
      %p64 = scmp.eq.s32.totalorder %s21, 0
      %p65 = por %p63, %p64
      %p66 = scmp.ne.s32.totalorder %s52, %s53
      %p67 = scmp.eq.s32.totalorder %s22, 2
      %p68 = por %p66, %p67
      %p70 = scmp.ne.s32.totalorder %s53, %s69
      %p71 = scmp.eq.s32.totalorder %s22, 0
      %p72 = por %p70, %p71
      %s73 = sadd.s32 %s25, %s24
      %s74 = sadd.s32 %s34, %s38
      %s75 = ssub.s32 %s23, %s42
      %s76 = ssub.s32 %s73, %s74
      %s77 = sor.u32 %s75, %s76
      %p78 = scmp.eq.s32.totalorder %s77, 0
      %s80 = sadd.s32 %s79, 1
      %s81 = scalar_select %p78, %s79, %s80
      %p84 = pneg %p78
      %p85 = scmp.eq.s32.totalorder %s16, 2
      %p86 = por %p84, %p85
      %p87 = scmp.ne.s32.totalorder %s79, %s82
      %p88 = scmp.eq.s32.totalorder %s16, 0
      %p89 = por %p87, %p88
      %p90 = scmp.ne.s32.totalorder %s79, %s82
      %p91 = scmp.eq.s32.totalorder %s21, 2
      %p92 = por %p90, %p91
      %p93 = scmp.ne.s32.totalorder %s82, %s83
      %p94 = scmp.eq.s32.totalorder %s21, 0
      %p95 = por %p93, %p94
      %p96 = scmp.ne.s32.totalorder %s82, %s83
      %p97 = scmp.eq.s32.totalorder %s22, 2
      %p98 = por %p96, %p97
      %p100 = scmp.ne.s32.totalorder %s83, %s99
      %p101 = scmp.eq.s32.totalorder %s22, 0
      %p102 = por %p100, %p101
      %s103 = ssub.s32 %s23, %s42
      %s104 = ssub.s32 %s24, %s38
      %s105 = sor.u32 %s103, %s104
      %p106 = scmp.eq.s32.totalorder %s105, 0
      %s108 = sadd.s32 %s107, 1
      %s109 = scalar_select %p106, %s107, %s108
      %p112 = pneg %p106
      %p113 = scmp.eq.s32.totalorder %s16, 2
      %p114 = por %p112, %p113
      %p115 = scmp.ne.s32.totalorder %s107, %s110
      %p116 = scmp.eq.s32.totalorder %s16, 0
      %p117 = por %p115, %p116
      %p118 = scmp.ne.s32.totalorder %s107, %s110
      %p119 = scmp.eq.s32.totalorder %s21, 2
      %p120 = por %p118, %p119
      %p121 = scmp.ne.s32.totalorder %s110, %s111
      %p122 = scmp.eq.s32.totalorder %s21, 0
      %p123 = por %p121, %p122
      %p124 = scmp.ne.s32.totalorder %s110, %s111
      %p125 = scmp.eq.s32.totalorder %s22, 2
      %p126 = por %p124, %p125
      %p128 = scmp.ne.s32.totalorder %s111, %s127
      %p129 = scmp.eq.s32.totalorder %s22, 0
      %p130 = por %p128, %p129
      %s131 = ssub.s32 %s23, %s42
      %p132 = scmp.eq.s32.totalorder %s131, 0
      %s134 = sadd.s32 %s133, 1
      %s135 = scalar_select %p132, %s133, %s134
      %p138 = pneg %p132
      %p139 = scmp.eq.s32.totalorder %s16, 2
      %p140 = por %p138, %p139
      %p141 = scmp.ne.s32.totalorder %s133, %s136
      %p142 = scmp.eq.s32.totalorder %s16, 0
      %p143 = por %p141, %p142
      %p144 = scmp.ne.s32.totalorder %s133, %s136
      %p145 = scmp.eq.s32.totalorder %s21, 2
      %p146 = por %p144, %p145
      %p147 = scmp.ne.s32.totalorder %s136, %s137
      %p148 = scmp.eq.s32.totalorder %s21, 0
      %p149 = por %p147, %p148
      %p150 = scmp.ne.s32.totalorder %s136, %s137
      %p151 = scmp.eq.s32.totalorder %s22, 2
      %p152 = por %p150, %p151
      %p154 = scmp.ne.s32.totalorder %s137, %s153
      %p155 = scmp.eq.s32.totalorder %s22, 0
      %p156 = por %p154, %p155
      %p157 = scmp.le.s32.totalorder 1, %s16
      %p158 = scmp.lt.s32.totalorder %s16, 4
      %p159 = pnand %p157, %p158
      %p160 = pneg %p159
      // Predicated region
      $region9: #{tpu_custom_call.1} parent=5 // pred_check
        _
      $region10: #{tpu_custom_call.1} parent=5 // pred_check_branch
        %162 = sbr.rel (%p159) target = $region12
      $region11: #{tpu_custom_call.1} parent=5 // pred_region
        %s163 = ssub.s32 %s16, 1
        // Predicated region
        $region13: #{tpu_custom_call.1} parent=11 // pred_check
          %p164 = pneg %p123
        $region14: #{tpu_custom_call.1} parent=11 // pred_check_branch
          %166 = sbr.rel (%p164) target = $region16
        $region15: #{tpu_custom_call.1} parent=11 // pred_region
          %s167 = smul.u32 2, %s27
          %s169 = ssub.s32 256, 256
          %170 = vsyncadd [#allocation6], %s169
          %s171 = smul.addr %s26, 2
          %s172 = sadd.s32 %s167, %s171
          %s173 = smul.addr %s172, 128
          %s174 = scalar_lea.hbm %s2, %s173
          %s176 = sshll.u32 [#allocation7], 4
          %s177 = int_to_ptr.vmem [resolvable:$true] %s176
          %179 = dma.hbm_to_vmem [thread:$0]  %s174, 256, %s177, [#allocation6]
        $region16: #{tpu_custom_call.1} parent=11 // pred_fallthru
          _
      $region12: #{tpu_custom_call.1} parent=5 // pred_fallthru
        _
      %p180 = scmp.lt.s32.totalorder %s16, 3
      // Predicated region
      $region17: #{tpu_custom_call.1} parent=5 // pred_check
        %p181 = pneg %p180
      $region18: #{tpu_custom_call.1} parent=5 // pred_check_branch
        %183 = sbr.rel (%p181) target = $region20
      $region19: #{tpu_custom_call.1} parent=5 // pred_region
        // Predicated region
        $region21: #{tpu_custom_call.1} parent=19 // pred_check
          %p184 = pneg %p59
        $region22: #{tpu_custom_call.1} parent=19 // pred_check_branch
          %186 = sbr.rel (%p184) target = $region24
        $region23: #{tpu_custom_call.1} parent=19 // pred_region
          %s187 = sand.u32 %s49, 1
          %s188 = scalar_lea.sflag [#allocation3], %s187
          %s189 = sand.u32 %s49, 1
          %s190 = smul.addr %s189, 16
          %s191 = scalar_lea.vmem [#allocation2], %s190
          %s192 = sadd.s32 %s25, %s24
          %s193 = smul.u32 2, %s192
          %s195 = ssub.s32 256, 256
          %196 = vsyncadd %s188, %s195
          %s197 = smul.addr %s23, 6
          %s198 = sadd.s32 %s193, %s197
          %s199 = smul.addr %s198, 128
          %s200 = scalar_lea.hbm %s0, %s199
          %s202 = sshll.u32 %s191, 4
          %s203 = int_to_ptr.vmem [resolvable:$true] %s202
          %205 = dma.hbm_to_vmem [thread:$0]  %s200, 256, %s203, %s188
        $region24: #{tpu_custom_call.1} parent=19 // pred_fallthru
          _
        // Predicated region
        $region25: #{tpu_custom_call.1} parent=19 // pred_check
          %p206 = pneg %p89
        $region26: #{tpu_custom_call.1} parent=19 // pred_check_branch
          %208 = sbr.rel (%p206) target = $region28
        $region27: #{tpu_custom_call.1} parent=19 // pred_region
          %s209 = sand.u32 %s16, 1
          %s210 = scalar_lea.sflag [#allocation6], %s209
          %s211 = sand.u32 %s79, 1
          %s212 = smul.addr %s211, 16
          %s213 = scalar_lea.vmem [#allocation5], %s212
          %s214 = sadd.s32 %s25, %s24
          %s215 = smul.u32 2, %s214
          %s217 = ssub.s32 256, 256
          %218 = vsyncadd %s210, %s217
          %s219 = smul.addr %s23, 6
          %s220 = sadd.s32 %s215, %s219
          %s221 = smul.addr %s220, 128
          %s222 = scalar_lea.hbm %s1, %s221
          %s224 = sshll.u32 %s213, 4
          %s225 = int_to_ptr.vmem [resolvable:$true] %s224
          %227 = dma.hbm_to_vmem [thread:$0]  %s222, 256, %s225, %s210
        $region28: #{tpu_custom_call.1} parent=19 // pred_fallthru
          _
      $region20: #{tpu_custom_call.1} parent=5 // pred_fallthru
        _
      %p228 = scmp.le.s32.totalorder 1, %s16
      %p229 = scmp.lt.s32.totalorder %s16, 4
      %p230 = pnand %p228, %p229
      %p231 = pneg %p230
      // Predicated region
      $region29: #{tpu_custom_call.1} parent=5 // pred_check
        _
      $region30: #{tpu_custom_call.1} parent=5 // pred_check_branch
        %233 = sbr.rel (%p230) target = $region32
      $region31: #{tpu_custom_call.1} parent=5 // pred_region
        %s234 = ssub.s32 %s16, 1
        %s235 = sand.u32 %s52, 1
        %s236 = scalar_lea.sflag [#allocation3], %s235
        %s237 = sand.u32 %s52, 1
        %s238 = smul.addr %s237, 16
        %s239 = scalar_lea.vmem [#allocation2], %s238
        // Predicated region
        $region33: #{tpu_custom_call.1} parent=31 // pred_check
          %p240 = pneg %p65
        $region34: #{tpu_custom_call.1} parent=31 // pred_check_branch
          %242 = sbr.rel (%p240) target = $region36
        $region35: #{tpu_custom_call.1} parent=31 // pred_region
          %243 = dma.done %s236, 256
        $region36: #{tpu_custom_call.1} parent=31 // pred_fallthru
          _
        %s244 = sand.u32 %s21, 1
        %s245 = scalar_lea.sflag [#allocation6], %s244
        %s246 = sand.u32 %s82, 1
        %s247 = smul.addr %s246, 16
        %s248 = scalar_lea.vmem [#allocation5], %s247
        // Predicated region
        $region37: #{tpu_custom_call.1} parent=31 // pred_check
          %p249 = pneg %p95
        $region38: #{tpu_custom_call.1} parent=31 // pred_check_branch
          %251 = sbr.rel (%p249) target = $region40
        $region39: #{tpu_custom_call.1} parent=31 // pred_region
          %252 = dma.done %s245, 256
        $region40: #{tpu_custom_call.1} parent=31 // pred_fallthru
          _
        // Predicated region
        $region41: #{tpu_custom_call.1} parent=31 // pred_check
          %p253 = pneg %p123
        $region42: #{tpu_custom_call.1} parent=31 // pred_check_branch
          %255 = sbr.rel (%p253) target = $region44
        $region43: #{tpu_custom_call.1} parent=31 // pred_region
          %256 = dma.done [#allocation6], 256
        $region44: #{tpu_custom_call.1} parent=31 // pred_fallthru
          _
        %s257 = sand.u32 %s52, 1
        %s258 = scalar_lea.sflag [#allocation3], %s257
        %s259 = sand.u32 %s52, 1
        %s260 = smul.addr %s259, 16
        %s261 = scalar_lea.vmem [#allocation2], %s260
        %p262 = pneg %p65
        %p263 = pneg %p62
        %s264 = sand.u32 %s21, 1
        %s265 = scalar_lea.sflag [#allocation6], %s264
        %s266 = sand.u32 %s82, 1
        %s267 = smul.addr %s266, 16
        %s268 = scalar_lea.vmem [#allocation5], %s267
        %p269 = pneg %p95
        %p270 = pneg %p92
        %p271 = pneg %p123
        %p272 = pneg %p120
        %p273 = pneg %p149
        %p274 = pneg %p146
        %s275 = sadd.s32 %s28, %s27
        %s276 = smul.u32 2, %s275
        %s277 = sadd.s32 %s28, %s27
        %s278 = smul.u32 2, %s277
        %s279 = smul.u32 2, %s27
        %v280 = vld [vmem:[%s239] sm:$0xff]
        %v281 = vld [vmem:[%s239 + $0x8] sm:$0xff]
        %v282 = vld [vmem:[%s248] sm:$0xff]
        %v283 = vld [vmem:[%s248 + $0x8] sm:$0xff]
        %v284 = vsub.f32 %v280, %v282
        %v285 = vsub.f32 %v281, %v283
        %v286 = vand.u32 2147483647, %v284
        %v287 = vand.u32 2147483647, %v285
        %v288 = vld [vmem:[#allocation7] sm:$0xff]
        %v289 = vld [vmem:[#allocation7 + $0x8] sm:$0xff]
        %v290 = vmul.f32 %v286, %v288
        %v291 = vmul.f32 %v287, %v289
        %v292 = vadd.f32 %v290, 0.0
        %v293 = vadd.f32 %v291, 0.0
        %p294 = scmp.eq.s32.totalorder %s27, 0
        %p295 = scmp.eq.s32.totalorder %s28, 0
        %p296 = pnand %p294, %p295
        %p297 = pneg %p296
        // Predicated region
        $region45: #{tpu_custom_call.1} parent=31 // pred_check
          _
        $region46: #{tpu_custom_call.1} parent=31 // pred_check_branch
          %299 = sbr.rel (%p296) target = $region48
        $region47: #{tpu_custom_call.1} parent=31 // pred_region
          %300 = vst [vmem:[#allocation8] sm:$0xff] 0.0
          %301 = vst [vmem:[#allocation8 + $0x8] sm:$0xff] 0.0
        $region48: #{tpu_custom_call.1} parent=31 // pred_fallthru
          _
        %v302 = vld [vmem:[#allocation8] sm:$0xff]
        %v303 = vld [vmem:[#allocation8 + $0x8] sm:$0xff]
        %v304 = vadd.f32 %v302, %v292
        %v305 = vadd.f32 %v303, %v293
        %306 = vst [vmem:[#allocation8] sm:$0xff] %v304
        %307 = vst [vmem:[#allocation8 + $0x8] sm:$0xff] %v305
        // Predicated region
        $region49: #{tpu_custom_call.1} parent=31 // pred_check
          %p308 = pneg %p146
        $region50: #{tpu_custom_call.1} parent=31 // pred_check_branch
          %310 = sbr.rel (%p308) target = $region52
        $region51: #{tpu_custom_call.1} parent=31 // pred_region
          %s312 = ssub.s32 256, 256
          %313 = vsyncadd [#allocation4], %s312
          %s314 = smul.addr %s26, 2
          %s315 = smul.addr %s314, 128
          %s316 = scalar_lea.hbm %s3, %s315
          %s318 = sshll.u32 [#allocation8], 4
          %s319 = int_to_ptr.vmem [resolvable:$true] %s318
          %321 = dma.vmem_to_hbm [thread:$0]  %s319, 256, %s316, [#allocation4]
        $region52: #{tpu_custom_call.1} parent=31 // pred_fallthru
          _
        // Predicated region
        $region53: #{tpu_custom_call.1} parent=31 // pred_check
          %p322 = pneg %p146
        $region54: #{tpu_custom_call.1} parent=31 // pred_check_branch
          %324 = sbr.rel (%p322) target = $region56
        $region55: #{tpu_custom_call.1} parent=31 // pred_region
          %325 = dma.done [#allocation4], 256
        $region56: #{tpu_custom_call.1} parent=31 // pred_fallthru
          _
      $region32: #{tpu_custom_call.1} parent=5 // pred_fallthru
        _
      %p326 = scmp.le.s32.totalorder 2, %s16
      // Predicated region
      $region57: #{tpu_custom_call.1} parent=5 // pred_check
        %p327 = pneg %p326
      $region58: #{tpu_custom_call.1} parent=5 // pred_check_branch
        %329 = sbr.rel (%p327) target = $region60
      $region59: #{tpu_custom_call.1} parent=5 // pred_region
        %s330 = ssub.s32 %s16, 2
      $region60: #{tpu_custom_call.1} parent=5 // pred_fallthru
        _
    $region6: #{tpu_custom_call.1} parent=1 // loop_footer
      %s20 = sadd.s32 1, %s16
    $region7: #{tpu_custom_call.1} parent=1 // loop_footer_branch
      %15 = sbr.rel target = $region3
    $region8: #{tpu_custom_call.1} parent=1 // loop_exit
      _
    %331 = vsyncpa [#allocation3], 1
    %s332 = scalar_lea.sflag [#allocation3], 1
    %333 = vsyncpa %s332, 1
    %334 = vsyncpa [#allocation6], 1
    %s335 = scalar_lea.sflag [#allocation6], 1
    %336 = vsyncpa %s335, 1
    %337 = vsyncpa [#allocation4], 1
    %s338 = scalar_lea.sflag [#allocation4], 1
    %339 = vsyncpa %s338, 1

</llo_original>
